<compile_context>
chip_gen: v7x
topology: tpu7x:2x2x1
jax: 0.10.0
libtpu: 0.0.40
codegen_flags: <defaults>
</compile_context>

<pallas_src>
import jax
import jax.numpy as jnp
import numpy as np
from jax.experimental import pallas as pl
from jax.experimental.pallas import tpu as pltpu


def _round_up(v, m):
    return (v + m - 1) // m * m


def _make_gnn_kernel(tk, y_resident):
    def kernel(a_ref, y_ref, s_ref, o_ref, acc_ref):
        # a_ref  : (tm, tk)                int8  adjacency tile (dst-major)
        # y_ref  : (tk, C_op) or (N_cols, C_op)  bf16  pre-projected x @ W_l^T
        # s_ref  : (tm, C_op)              f32   self/root term x @ W_r^T + b_l
        # o_ref  : (tm, C_op)              bf16  output block (resident across k)
        # acc_ref: (tm, C_op)              f32   accumulator (resident across k)
        k = pl.program_id(1)

        @pl.when(k == 0)
        def _init():
            acc_ref[...] = jnp.zeros_like(acc_ref)

        # int8 -> bf16 upcast right before the MXU dot (A bytes stay int8 in HBM/VMEM).
        a = a_ref[...].astype(jnp.bfloat16)
        if y_resident:
            off = pl.multiple_of(k * tk, 128)
            yk = y_ref[pl.ds(off, tk), :]
        else:
            yk = y_ref[...]
        acc_ref[...] += jnp.dot(a, yk, preferred_element_type=jnp.float32)

        @pl.when(k == pl.num_programs(1) - 1)
        def _finalize():
            # Add the exact-f32 self/root term (bias already folded in) and activate.
            o_ref[...] = jnp.tanh(acc_ref[...] + s_ref[...]).astype(o_ref.dtype)

    return kernel


def gnn_forward(x, edge_index, w_l, w_r, b_l, *, tm_max=512, tk_max=8192,
                y_resident_budget=4 * 1024 * 1024):
    """x: (N, C_in) f32, edge_index: (2, E) int, w_l/w_r: (C_out, C_in), b_l: (C_out,)."""
    n, _ = x.shape
    c_out = w_l.shape[0]

    # Tile sizes: tm rounded to 32 (int8 native sublane tile), tk to 128 lanes.
    tm = min(tm_max, _round_up(n, 32))
    tk = min(tk_max, _round_up(n, 128))
    n_rows = _round_up(n, tm)
    n_cols = _round_up(n, tk)
    c_out_p = _round_up(c_out, 128)       # lane-dense output (unmasked stores)

    # Glue: dense adjacency from edge_index. Counts built in int32 (exact), stored as
    # int8 for the HBM stream (exact for per-(dst,src) multiplicities <= 127).
    # TODO(synk): for very sparse graphs replace the dense O(N^2) adjacency with a CSR
    # segment-sum path (PrefetchScalarGridSpec row offsets + DMA-gathered src rows).
    src = edge_index[0].astype(jnp.int32)
    dst = edge_index[1].astype(jnp.int32)
    adj = (jnp.zeros((n_rows, n_cols), jnp.int32)
           .at[dst, src].add(1)
           .astype(jnp.int8))

    x32 = x.astype(jnp.float32)
    # Pre-projected aggregation operand (bf16 on the MXU path), padded lane-dense.
    y = jnp.zeros((n_cols, c_out_p), jnp.bfloat16)
    y = y.at[:n, :c_out].set((x32 @ w_l.T.astype(jnp.float32)).astype(jnp.bfloat16))
    # Exact-f32 self/root term + bias, added in the finalize. Padded rows stay zero.
    s = jnp.zeros((n_rows, c_out_p), jnp.float32)
    s = s.at[:n, :c_out].set(x32 @ w_r.T.astype(jnp.float32) + b_l.astype(jnp.float32))

    grid = (n_rows // tm, n_cols // tk)

    # Keep y VMEM-resident (single DMA for the whole grid) when it is small enough;
    # otherwise stream a (tk, C_op) block per reduction step.
    y_resident = (n_cols * c_out_p * 2) <= y_resident_budget
    if y_resident:
        y_spec = pl.BlockSpec((n_cols, c_out_p), lambda i, k: (0, 0))
    else:
        y_spec = pl.BlockSpec((tk, c_out_p), lambda i, k: (k, 0))

    out = pl.pallas_call(
        _make_gnn_kernel(tk, y_resident),
        out_shape=jax.ShapeDtypeStruct((n_rows, c_out_p), jnp.bfloat16),
        grid_spec=pltpu.PrefetchScalarGridSpec(
            num_scalar_prefetch=0,
            grid=grid,
            in_specs=[
                pl.BlockSpec((tm, tk), lambda i, k: (i, k)),        # A tile (int8)
                y_spec,                                             # x @ W_l^T (bf16)
                pl.BlockSpec((tm, c_out_p), lambda i, k: (i, 0)),   # self term (f32)
            ],
            out_specs=pl.BlockSpec((tm, c_out_p), lambda i, k: (i, 0)),
            scratch_shapes=[pltpu.VMEM((tm, c_out_p), jnp.float32)],
        ),
        compiler_params=pltpu.CompilerParams(
            dimension_semantics=("parallel", "arbitrary"),
            vmem_limit_bytes=48 * 1024 * 1024,   # fits v7x's 64 MiB physical VMEM
        ),
    )(adj, y, s)

    return out[:n, :c_out].astype(jnp.float32)


def gnn_reference(x, edge_index, w_l, w_r, b_l):
    n = x.shape[0]
    src, dst = edge_index[0], edge_index[1]
    adj = jnp.zeros((n, n), dtype=jnp.float32).at[dst, src].add(1.0)
    agg = adj @ x
    return jnp.tanh(agg @ w_l.T + b_l + x @ w_r.T)


if __name__ == "__main__":
    key = jax.random.PRNGKey(0)
    k_x, k_e1, k_e2, k_wl, k_wr, k_b = jax.random.split(key, 6)

    N = 16          # nodes
    C_IN = 8        # in_channels (lazily inferred by SAGEConv((-1,-1), ...))
    C_OUT = 32      # out_channels
    E = 48          # edges

    x = jax.random.normal(k_x, (N, C_IN), dtype=jnp.float32)
    src = jax.random.randint(k_e1, (E,), 0, N, dtype=jnp.int32)
    dst = jax.random.randint(k_e2, (E,), 0, N, dtype=jnp.int32)
    edge_index = jnp.stack([src, dst], axis=0)  # (2, E)

    # SAGEConv params: lin_l (W_l, b_l) applied to aggregated, lin_r (W_r) to root.
    scale = 1.0 / np.sqrt(C_IN)
    w_l = jax.random.uniform(k_wl, (C_OUT, C_IN), jnp.float32, -scale, scale)
    w_r = jax.random.uniform(k_wr, (C_OUT, C_IN), jnp.float32, -scale, scale)
    b_l = jax.random.uniform(k_b, (C_OUT,), jnp.float32, -scale, scale)

    out = jax.block_until_ready(gnn_forward(x, edge_index, w_l, w_r, b_l))
    ref = jax.block_until_ready(gnn_reference(x, edge_index, w_l, w_r, b_l))

    assert out.shape == (N, C_OUT)
    # bf16 aggregation operand / bf16 output (f32 accumulate, exact-f32 self term and
    # exact int8 adjacency counts) -> modest tolerance vs the pure-f32 reference.
    err = float(np.max(np.abs(np.asarray(out) - np.asarray(ref))))
    assert np.allclose(np.asarray(out), np.asarray(ref), rtol=5e-2, atol=5e-2), err

    print("KERNEL_OK")
</pallas_src>

<mosaic_0001>
module attributes {stable_mosaic.version = 11 : i64} {
  func.func @kernel(%arg0: i32, %arg1: i32, %arg2: memref<32x128xi8, #tpu.memory_space<vmem>>, %arg3: memref<128x128xbf16, #tpu.memory_space<vmem>>, %arg4: memref<32x128xf32, #tpu.memory_space<vmem>>, %arg5: memref<32x128xbf16, #tpu.memory_space<vmem>>, %arg6: memref<32x128xf32, #tpu.memory_space<vmem>>) attributes {dimension_semantics = [#tpu.dimension_semantics<parallel>, #tpu.dimension_semantics<arbitrary>], iteration_bounds = array<i64: 1, 1>, scalar_prefetch = 0 : i64, scratch_operands = 1 : i64, tpu.core_type = #tpu.core_type<tc>, window_params = [{transform_indices = @transform_0, window_bounds = array<i64: 32, 128>}, {pipeline_mode = #tpu.pipeline_mode<synchronous>, transform_indices = @transform_1, window_bounds = array<i64: 128, 128>}, {transform_indices = @transform_2, window_bounds = array<i64: 32, 128>}, {transform_indices = @transform_3, window_bounds = array<i64: 32, 128>}]} {
    %c0_i32 = arith.constant 0 : i32
    %0 = arith.cmpi eq, %arg1, %c0_i32 : i32
    %1 = arith.extui %0 : i1 to i32
    %c0_i32_0 = arith.constant 0 : i32
    %2 = arith.cmpi ne, %1, %c0_i32_0 : i32
    scf.if %2 {
      %cst_9 = arith.constant 0.000000e+00 : f32
      %16 = vector.broadcast %cst_9 : f32 to vector<32x128xf32>
      %c0_10 = arith.constant 0 : index
      %c0_11 = arith.constant 0 : index
      %17 = vector.load %arg6[%c0_10, %c0_11] : memref<32x128xf32, #tpu.memory_space<vmem>>, vector<32x128xf32>
      tpu.vector_store %arg6[%c0_10, %c0_11], %16 {strides = array<i32>} : memref<32x128xf32, #tpu.memory_space<vmem>>, vector<32x128xf32>,
    } else {
    }
    %c0 = arith.constant 0 : index
    %c0_1 = arith.constant 0 : index
    %3 = vector.load %arg2[%c0, %c0_1] : memref<32x128xi8, #tpu.memory_space<vmem>>, vector<32x128xi8>
    %4 = arith.sitofp %3 : vector<32x128xi8> to vector<32x128xbf16>
    %c128_i32 = arith.constant 128 : i32
    %5 = arith.muli %arg1, %c128_i32 : i32
    %6 = tpu.assume_multiple %5, 128 : i32
    %7 = arith.index_cast %6 : i32 to index
    %c0_2 = arith.constant 0 : index
    %8 = vector.load %arg3[%7, %c0_2] : memref<128x128xbf16, #tpu.memory_space<vmem>>, vector<128x128xbf16>
    %c0_3 = arith.constant 0 : index
    %c0_4 = arith.constant 0 : index
    %9 = vector.load %arg6[%c0_3, %c0_4] : memref<32x128xf32, #tpu.memory_space<vmem>>, vector<32x128xf32>
    %cst = arith.constant dense<0.000000e+00> : vector<32x128xf32>
    %10 = tpu.matmul %4, %8, %cst {dimension_numbers = #tpu.dot_dimension_numbers<[1], [0], [0], [1], [0, 0, 1, 1], [], []>} : vector<32x128xbf16>, vector<128x128xbf16>, vector<32x128xf32> -> vector<32x128xf32>
    %11 = arith.addf %9, %10 : vector<32x128xf32>
    %c0_5 = arith.constant 0 : index
    %c0_6 = arith.constant 0 : index
    %12 = vector.load %arg6[%c0_5, %c0_6] : memref<32x128xf32, #tpu.memory_space<vmem>>, vector<32x128xf32>
    tpu.vector_store %arg6[%c0_5, %c0_6], %11 {strides = array<i32>} : memref<32x128xf32, #tpu.memory_space<vmem>>, vector<32x128xf32>,
    %c0_i32_7 = arith.constant 0 : i32
    %13 = arith.cmpi eq, %arg1, %c0_i32_7 : i32
    %14 = arith.extui %13 : i1 to i32
    %c0_i32_8 = arith.constant 0 : i32
    %15 = arith.cmpi ne, %14, %c0_i32_8 : i32
    scf.if %15 {
      %c0_9 = arith.constant 0 : index
      %c0_10 = arith.constant 0 : index
      %16 = vector.load %arg6[%c0_9, %c0_10] : memref<32x128xf32, #tpu.memory_space<vmem>>, vector<32x128xf32>
      %c0_11 = arith.constant 0 : index
      %c0_12 = arith.constant 0 : index
      %17 = vector.load %arg4[%c0_11, %c0_12] : memref<32x128xf32, #tpu.memory_space<vmem>>, vector<32x128xf32>
      %18 = arith.addf %16, %17 : vector<32x128xf32>
      %19 = math.tanh %18 : vector<32x128xf32>
      %20 = arith.truncf %19 : vector<32x128xf32> to vector<32x128xbf16>
      %c0_13 = arith.constant 0 : index
      %c0_14 = arith.constant 0 : index
      %21 = vector.load %arg5[%c0_13, %c0_14] : memref<32x128xbf16, #tpu.memory_space<vmem>>, vector<32x128xbf16>
      tpu.vector_store %arg5[%c0_13, %c0_14], %20 {strides = array<i32>} : memref<32x128xbf16, #tpu.memory_space<vmem>>, vector<32x128xbf16>,
    } else {
    }
    return
  }
  func.func @transform_0(%arg0: i32, %arg1: i32) -> (i32, i32) {
    %c0_i32 = arith.constant 0 : i32
    return %arg0, %arg1 : i32, i32
  }
  func.func @transform_1(%arg0: i32, %arg1: i32) -> (i32, i32) {
    %c0_i32 = arith.constant 0 : i32
    %c0_i32_0 = arith.constant 0 : i32
    %c0_i32_1 = arith.constant 0 : i32
    return %c0_i32, %c0_i32_0 : i32, i32
  }
  func.func @transform_2(%arg0: i32, %arg1: i32) -> (i32, i32) {
    %c0_i32 = arith.constant 0 : i32
    %c0_i32_0 = arith.constant 0 : i32
    return %arg0, %c0_i32 : i32, i32
  }
  func.func @transform_3(%arg0: i32, %arg1: i32) -> (i32, i32) {
    %c0_i32 = arith.constant 0 : i32
    %c0_i32_0 = arith.constant 0 : i32
    return %arg0, %c0_i32 : i32, i32
  }
}

</mosaic_0001>

<llo_original>
// kernel: tpu_custom_call.1
$region0: #{tpu_custom_call.1}
  #allocation0 [shape = 'u32[]', space=smem, size = 0x4, offset = 0x4, fixed_abs, tag = 'smem constant byte address 0x4 - core index']
  #allocation1 [shape = 'u32[144,128]{1,0:T(1,128)}', space=vmem, size = 0x12000, scoped, tag = 'internal scratch']
  #allocation2 [shape = 'f32[32,128]{1,0:T(8,128)}', space=vmem, size = 0x4000, scoped, tag = 'scratch operand']
  %s0 = inlined_call_operand.hbm [shape: s8[32,128], index: 0, kind: input, shape index: {}]
  %s1 = inlined_call_operand.hbm [shape: bf16[128,128], index: 1, kind: input, shape index: {}]
  %s2 = inlined_call_operand.hbm [shape: f32[32,128], index: 2, kind: input, shape index: {}]
  %s3 = inlined_call_operand.hbm [shape: bf16[32,128], index: 3, kind: output, shape index: {}]
  %s4 = sld [smem:[#allocation0]]
  $region42: #{tpu_custom_call.1} parent=0
    _
  %s6 = ssub.s32 1, %s4
  %s7 = scalar_select 0, %s6, %s4
  $region1: #{tpu_custom_call.1} parent=0
    #allocation3 [shape = 'u8[4096]{0}', space=vmem, size = 0x1000, scoped, tag = 'input window, operand 0, single buffered']
    #allocation4 [shape = 's32[1]{0}', space=sflag, size = 0x4, scoped, tag = 'scoped memory for tpu_custom_call.1']
    #allocation5 [shape = 's32[1]{0}', space=sflag, size = 0x4, scoped, tag = 'scoped memory for tpu_custom_call.1']
    #allocation6 [shape = 'u8[32768]{0}', space=vmem, size = 0x8000, scoped, tag = 'input window, operand 1, single buffered']
    #allocation7 [shape = 's32[1]{0}', space=sflag, size = 0x4, scoped, tag = 'scoped memory for tpu_custom_call.1']
    #allocation8 [shape = 'u8[16384]{0}', space=vmem, size = 0x4000, scoped, tag = 'input window, operand 2, single buffered']
    #allocation9 [shape = 'u8[8192]{0}', space=vmem, size = 0x2000, scoped, tag = 'output window, operand 0, single buffered']
    %8 = vsyncpa [#allocation4], 0
    %9 = vsyncpa [#allocation7], 0
    %10 = vsyncpa [#allocation5], 0
    // Predicated region
    $region2: #{tpu_custom_call.1} parent=1 // pred_check
      _
    $region3: #{tpu_custom_call.1} parent=1 // pred_check_branch
      %12 = sbr.rel (0) target = $region5
    $region4: #{tpu_custom_call.1} parent=1 // pred_region
      %s14 = ssub.s32 128, 128
      %15 = vsyncadd [#allocation4], %s14
      %s17 = sshll.u32 [#allocation3], 4
      %s18 = int_to_ptr.vmem [resolvable:$true] %s17
      %20 = dma.hbm_to_vmem [thread:$0]  %s0, 128, %s18, [#allocation4]
    $region5: #{tpu_custom_call.1} parent=1 // pred_fallthru
      _
    // Predicated region
    $region6: #{tpu_custom_call.1} parent=1 // pred_check
      _
    $region7: #{tpu_custom_call.1} parent=1 // pred_check_branch
      %22 = sbr.rel (0) target = $region9
    $region8: #{tpu_custom_call.1} parent=1 // pred_region
      %s24 = ssub.s32 1024, 1024
      %25 = vsyncadd [#allocation7], %s24
      %s26 = sshll.u32 [#allocation6], 4
      %s27 = int_to_ptr.vmem [resolvable:$true] %s26
      %32 = dma.hbm_to_vmem [thread:$0]  %s1, 1024, %s27, [#allocation7], 64, 64, 4
    $region9: #{tpu_custom_call.1} parent=1 // pred_fallthru
      _
    // Predicated region
    $region10: #{tpu_custom_call.1} parent=1 // pred_check
      _
    $region11: #{tpu_custom_call.1} parent=1 // pred_check_branch
      %34 = sbr.rel (0) target = $region13
    $region12: #{tpu_custom_call.1} parent=1 // pred_region
      %s36 = ssub.s32 512, 512
      %37 = vsyncadd [#allocation7], %s36
      %s38 = sshll.u32 [#allocation8], 4
      %s39 = int_to_ptr.vmem [resolvable:$true] %s38
      %44 = dma.hbm_to_vmem [thread:$0]  %s2, 512, %s39, [#allocation7], 128, 128, 8
    $region13: #{tpu_custom_call.1} parent=1 // pred_fallthru
      _
    // Predicated region
    $region14: #{tpu_custom_call.1} parent=1 // pred_check
      _
    $region15: #{tpu_custom_call.1} parent=1 // pred_check_branch
      %46 = sbr.rel (0) target = $region17
    $region16: #{tpu_custom_call.1} parent=1 // pred_region
      %47 = dma.done [#allocation4], 128
    $region17: #{tpu_custom_call.1} parent=1 // pred_fallthru
      _
    // Predicated region
    $region18: #{tpu_custom_call.1} parent=1 // pred_check
      _
    $region19: #{tpu_custom_call.1} parent=1 // pred_check_branch
      %49 = sbr.rel (0) target = $region21
    $region20: #{tpu_custom_call.1} parent=1 // pred_region
      %50 = dma.done [#allocation7], 1024
    $region21: #{tpu_custom_call.1} parent=1 // pred_fallthru
      _
    // Predicated region
    $region22: #{tpu_custom_call.1} parent=1 // pred_check
      _
    $region23: #{tpu_custom_call.1} parent=1 // pred_check_branch
      %52 = sbr.rel (0) target = $region25
    $region24: #{tpu_custom_call.1} parent=1 // pred_region
      %53 = dma.done [#allocation7], 512
    $region25: #{tpu_custom_call.1} parent=1 // pred_fallthru
      _
    %p55 = scmp.eq.s32.totalorder 0, 0
    // Predicated region
    $region26: #{tpu_custom_call.1} parent=1 // pred_check
      %p56 = pneg %p55
    $region27: #{tpu_custom_call.1} parent=1 // pred_check_branch
      %58 = sbr.rel (%p56) target = $region29
    $region28: #{tpu_custom_call.1} parent=1 // pred_region
      %59 = vst [vmem:[#allocation2] sm:$0xff] 0.0
      %60 = vst [vmem:[#allocation2 + $0x8] sm:$0xff] 0.0
      %61 = vst [vmem:[#allocation2 + $0x10] sm:$0xff] 0.0
      %62 = vst [vmem:[#allocation2 + $0x18] sm:$0xff] 0.0
    $region29: #{tpu_custom_call.1} parent=1 // pred_fallthru
      _
    %v63 = vld [vmem:[#allocation3] sm:$0xff]
    %v64 = vunpack.c.l.s8.bf16 %v63
    %v65 = vunpack.c.h.s8.bf16 %v63
    %s66 = smul.u32 0, 128
    %s67 = sshra.s32 %s66, 3
    %s68 = sand.u32 %s66, 7
    %s69 = smul.addr %s67, 4
    %s70 = scalar_lea.vmem [#allocation6], %s69
    %v71 = vld [vmem:[%s70] sm:$0xf]
    %v72 = vld [vmem:[%s70 + $0x4] sm:$0xf]
    %v73 = vld [vmem:[%s70 + $0x8] sm:$0xf]
    %v74 = vld [vmem:[%s70 + $0xc] sm:$0xf]
    %v75 = vld [vmem:[%s70 + $0x10] sm:$0xf]
    %v76 = vld [vmem:[%s70 + $0x14] sm:$0xf]
    %v77 = vld [vmem:[%s70 + $0x18] sm:$0xf]
    %v78 = vld [vmem:[%s70 + $0x1c] sm:$0xf]
    %v79 = vld [vmem:[%s70 + $0x20] sm:$0xf]
    %v80 = vld [vmem:[%s70 + $0x24] sm:$0xf]
    %v81 = vld [vmem:[%s70 + $0x28] sm:$0xf]
    %v82 = vld [vmem:[%s70 + $0x2c] sm:$0xf]
    %v83 = vld [vmem:[%s70 + $0x30] sm:$0xf]
    %v84 = vld [vmem:[%s70 + $0x34] sm:$0xf]
    %v85 = vld [vmem:[%s70 + $0x38] sm:$0xf]
    %v86 = vld [vmem:[%s70 + $0x3c] sm:$0xf]
    %v87 = vld [vmem:[#allocation2] sm:$0xff]
    %v88 = vld [vmem:[#allocation2 + $0x8] sm:$0xff]
    %v89 = vld [vmem:[#allocation2 + $0x10] sm:$0xff]
    %v90 = vld [vmem:[#allocation2 + $0x18] sm:$0xff]
    %v107 = vunpack.c.l.b16 %v71
    %v108 = vunpack.c.l.b16 %v72
    %v109 = vunpack.c.l.b16 %v73
    %v110 = vunpack.c.l.b16 %v74
    %v111 = vunpack.c.l.b16 %v75
    %v112 = vunpack.c.l.b16 %v76
    %v113 = vunpack.c.l.b16 %v77
    %v114 = vunpack.c.l.b16 %v78
    %v115 = vunpack.c.l.b16 %v79
    %v116 = vunpack.c.l.b16 %v80
    %v117 = vunpack.c.l.b16 %v81
    %v118 = vunpack.c.l.b16 %v82
    %v119 = vunpack.c.l.b16 %v83
    %v120 = vunpack.c.l.b16 %v84
    %v121 = vunpack.c.l.b16 %v85
    %v122 = vunpack.c.l.b16 %v86
    %v123 = vpack.c.b16 %v108, %v107
    %v124 = vpack.c.b16 %v110, %v109
    %v125 = vpack.c.b16 %v112, %v111
    %v126 = vpack.c.b16 %v114, %v113
    %v127 = vpack.c.b16 %v116, %v115
    %v128 = vpack.c.b16 %v118, %v117
    %v129 = vpack.c.b16 %v120, %v119
    %v130 = vpack.c.b16 %v122, %v121
    %139 = vmatprep.subr.bf16.mxu0 0
    %140 = vmatpush1.bf16.msra.mxu0 %v123
    %141 = vmatprep.subr.bf16.mxu0 0
    %142 = vmatpush1.bf16.msra.mxu0 %v124
    %143 = vmatprep.subr.bf16.mxu0 0
    %144 = vmatpush1.bf16.msra.mxu0 %v125
    %145 = vmatprep.subr.bf16.mxu0 0
    %146 = vmatpush1.bf16.msra.mxu0 %v126
    %147 = vmatprep.subr.bf16.mxu0 0
    %148 = vmatpush1.bf16.msra.mxu0 %v127
    %149 = vmatprep.subr.bf16.mxu0 0
    %150 = vmatpush1.bf16.msra.mxu0 %v128
    %151 = vmatprep.subr.bf16.mxu0 0
    %152 = vmatpush1.bf16.msra.mxu0 %v129
    %153 = vmatprep.subr.bf16.mxu0 0
    %154 = vmatpush1.bf16.msra.mxu0 %v130
    %155 = vmatprep.subr.bf16.mxu0 0
    %156 = vmatpush1.bf16.msra.mxu0 0
    %157 = vmatprep.subr.bf16.mxu0 0
    %158 = vmatpush1.bf16.msra.mxu0 0
    %159 = vmatprep.subr.bf16.mxu0 0
    %160 = vmatpush1.bf16.msra.mxu0 0
    %161 = vmatprep.subr.bf16.mxu0 0
    %162 = vmatpush1.bf16.msra.mxu0 0
    %163 = vmatprep.subr.bf16.mxu0 0
    %164 = vmatpush1.bf16.msra.mxu0 0
    %165 = vmatprep.subr.bf16.mxu0 0
    %166 = vmatpush1.bf16.msra.mxu0 0
    %167 = vmatprep.subr.bf16.mxu0 0
    %168 = vmatpush1.bf16.msra.mxu0 0
    %169 = vmatprep.subr.bf16.mxu0 0
    %170 = vmatpush1.bf16.msra.mxu0 0
    %171 = vmatprep.mubr.bf16.mxu0 0
    %172 = vmatmul.mubr.bf16.gmra.mrb[0].mxu0 %v64
    %v173 = vpop.f32.mrb[0].mxu0
    %v174 = vadd.f32 0.0, %v173
    %v175 = vpop.f32.mrb[0].mxu0
    %v176 = vpop.f32.mrb[0].mxu0
    %v177 = vadd.f32 0.0, %v176
    %v178 = vpop.f32.mrb[0].mxu0
    %179 = vmatprep.mubr.bf16.mxu0 0
    %180 = vmatmul.mubr.bf16.gmra.mrb[0].mxu0 %v65
    %v181 = vpop.f32.mrb[0].mxu0
    %v182 = vadd.f32 0.0, %v181
    %v183 = vpop.f32.mrb[0].mxu0
    %v184 = vpop.f32.mrb[0].mxu0
    %v185 = vadd.f32 0.0, %v184
    %v186 = vpop.f32.mrb[0].mxu0
    %187 = vdwg.mxu0
    %v188 = vadd.f32 %v87, %v174
    %v189 = vadd.f32 %v88, %v177
    %v190 = vadd.f32 %v89, %v182
    %v191 = vadd.f32 %v90, %v185
    %192 = vst [vmem:[#allocation2] sm:$0xff] %v188
    %193 = vst [vmem:[#allocation2 + $0x8] sm:$0xff] %v189
    %194 = vst [vmem:[#allocation2 + $0x10] sm:$0xff] %v190
    %195 = vst [vmem:[#allocation2 + $0x18] sm:$0xff] %v191
    // Predicated region
    $region30: #{tpu_custom_call.1} parent=1 // pred_check
      %p196 = pneg %p55
    $region31: #{tpu_custom_call.1} parent=1 // pred_check_branch
      %198 = sbr.rel (%p196) target = $region33
    $region32: #{tpu_custom_call.1} parent=1 // pred_region
      %v199 = vld [vmem:[#allocation2] sm:$0xff]
      %v200 = vld [vmem:[#allocation2 + $0x8] sm:$0xff]
      %v201 = vld [vmem:[#allocation2 + $0x10] sm:$0xff]
      %v202 = vld [vmem:[#allocation2 + $0x18] sm:$0xff]
      %v203 = vld [vmem:[#allocation8] sm:$0xff]
      %v204 = vld [vmem:[#allocation8 + $0x8] sm:$0xff]
      %v205 = vld [vmem:[#allocation8 + $0x10] sm:$0xff]
      %v206 = vld [vmem:[#allocation8 + $0x18] sm:$0xff]
      %v207 = vadd.f32 %v199, %v203
      %v208 = vadd.f32 %v200, %v204
      %v209 = vadd.f32 %v201, %v205
      %v210 = vadd.f32 %v202, %v206
      %v211 = vtanh.pop %v207
      %v212 = vtanh.pop %v208
      %v213 = vtanh.pop %v209
      %v214 = vtanh.pop %v210
      %v215 = vpack.c.bf16 %v212, %v211
      %v216 = vpack.c.bf16 %v214, %v213
      %v219 = vunpack.c.l.b16 %v215
      %v220 = vunpack.c.h.b16 %v215
      %v221 = vunpack.c.l.b16 %v216
      %v222 = vunpack.c.h.b16 %v216
      %v223 = vpack.c.b16 %v219, %v219
      %v224 = vpack.c.b16 %v220, %v220
      %v225 = vpack.c.b16 %v221, %v221
      %v226 = vpack.c.b16 %v222, %v222
      %231 = vst [vmem:[#allocation9] sm:$0xf] %v223
      %232 = vst [vmem:[#allocation9 + $0x4] sm:$0xf] %v224
      %233 = vst [vmem:[#allocation9 + $0x8] sm:$0xf] %v225
      %234 = vst [vmem:[#allocation9 + $0xc] sm:$0xf] %v226
    $region33: #{tpu_custom_call.1} parent=1 // pred_fallthru
      _
    // Predicated region
    $region34: #{tpu_custom_call.1} parent=1 // pred_check
      _
    $region35: #{tpu_custom_call.1} parent=1 // pred_check_branch
      %236 = sbr.rel (0) target = $region37
    $region36: #{tpu_custom_call.1} parent=1 // pred_region
      %s238 = ssub.s32 256, 256
      %239 = vsyncadd [#allocation5], %s238
      %s240 = sshll.u32 [#allocation9], 4
      %s241 = int_to_ptr.vmem [resolvable:$true] %s240
      %246 = dma.vmem_to_hbm [thread:$0]  %s241, 256, %s3, [#allocation5], 64, 64, 4
    $region37: #{tpu_custom_call.1} parent=1 // pred_fallthru
      _
    // Predicated region
    $region38: #{tpu_custom_call.1} parent=1 // pred_check
      _
    $region39: #{tpu_custom_call.1} parent=1 // pred_check_branch
      %248 = sbr.rel (0) target = $region41
    $region40: #{tpu_custom_call.1} parent=1 // pred_region
      %249 = dma.done [#allocation5], 256
    $region41: #{tpu_custom_call.1} parent=1 // pred_fallthru
      _
    %250 = vsyncpa [#allocation4], 1
    %251 = vsyncpa [#allocation7], 1
    %252 = vsyncpa [#allocation5], 1

</llo_original>
